<compile_context>
chip_gen: v7x
topology: tpu7x:2x2x1
jax: 0.10.0
libtpu: 0.0.40
codegen_flags: <defaults>
</compile_context>

<pallas_src>
import functools
import random

import jax
import jax.numpy as jnp
from jax.experimental import pallas as pl
from jax.experimental.pallas import tpu as pltpu


_MIB = 1024 * 1024


def _cdiv(a, b):
    return -(-a // b)


def _round_up(a, b):
    return _cdiv(a, b) * b


def _vmem_budget():
    """Generation-aware VMEM sizing (128 MiB on v5e/v6e, 64 MiB on v7x)."""
    cap = 64 * _MIB  # conservative default = v7x
    try:
        info = pltpu.get_tpu_info()
        cap = int(getattr(info, "vmem_capacity_bytes", cap)) or cap
    except Exception:
        pass
    vmem_limit = max(32 * _MIB, cap - 16 * _MIB)   # ~112 MiB v5e/v6e, ~48 MiB v7x
    return cap, vmem_limit


def _choose_channel_tile(C, HW, itemsize, *, budget_bytes, streams, batch):
    """Largest legal channel tile whose VMEM footprint fits `budget_bytes`.

    `streams` = number of double-buffered (1, tc, HW) streams (2 for the
    read-only stats pass, 4 for the read+write apply pass).  Tiles are
    multiples of the dtype sublane pack (8 f32 / 16 bf16 / 32 int8) so vregs
    stay fully packed; the grid uses cdiv so tc does NOT have to divide C.
    """
    pack = max(8, 32 // max(1, itemsize))
    if C <= pack:
        return C                                   # full-dim block is always legal
    per_channel = HW * itemsize
    max_tc = max(1, budget_bytes // (streams * per_channel))
    tc = min(C, (max_tc // pack) * pack)
    if tc < pack:
        tc = pack                                  # smallest legal tile
    # Keep >= 4 grid steps so both v7x TensorCores get pipelined work.
    while tc > pack and batch * _cdiv(C, tc) < 4:
        tc = max(pack, ((tc // 2) // pack) * pack)
    return tc


# ------------------------------ Fused kernel ------------------------------- #

def _fused_kernel(perm_ref, lam_ref, x_ref, o_ref, mu_scr, sig_scr, *, eps, denom):
    # x_ref : VMEM (B, C, HW) resident; perm_ref/lam_ref : SMEM (B,)
    # o_ref : VMEM (1, C, HW) block for batch b; scratch : VMEM (B, C, 1) f32
    ph = pl.program_id(0)
    b = pl.program_id(1)

    @pl.when(ph == 0)
    def _():
        xb = x_ref[b].astype(jnp.float32)                        # (C, HW)
        mu = jnp.mean(xb, axis=-1, keepdims=True)                # (C, 1)
        var = jnp.sum((xb - mu) ** 2, axis=-1, keepdims=True) * (1.0 / denom)
        mu_scr[b] = mu
        sig_scr[b] = jnp.sqrt(var + eps)

    @pl.when(ph == 1)
    def _():
        j = perm_ref[b]
        lam = lam_ref[b]
        mu1, sg1 = mu_scr[b], sig_scr[b]                         # (C, 1)
        mu2, sg2 = mu_scr[j], sig_scr[j]
        mu_mix = lam * mu1 + (1.0 - lam) * mu2
        sg_mix = lam * sg1 + (1.0 - lam) * sg2
        a = sg_mix / sg1
        bias = mu_mix - mu1 * a
        xb = x_ref[b].astype(jnp.float32)                        # (C, HW)
        o_ref[0] = (xb * a + bias).astype(o_ref.dtype)


def _mixstyle_fused(x3, perm, lmda, eps, vmem_limit):
    B, C, HW = x3.shape
    denom = float(max(HW - 1, 1))   # torch unbiased var; guard HW==1
    kernel = functools.partial(_fused_kernel, eps=eps, denom=denom)
    return pl.pallas_call(
        kernel,
        out_shape=jax.ShapeDtypeStruct((B, C, HW), x3.dtype),
        grid_spec=pltpu.PrefetchScalarGridSpec(
            num_scalar_prefetch=2,
            grid=(2, B),                                # (phase, batch)
            in_specs=[pl.BlockSpec((B, C, HW), lambda ph, b, perm, lam: (0, 0, 0))],
            # Output index stays 0 through all of phase 0 (never flushed until
            # phase 1 writes it), then walks the batch blocks in phase 1.
            out_specs=pl.BlockSpec((1, C, HW), lambda ph, b, perm, lam: (ph * b, 0, 0)),
            scratch_shapes=[pltpu.VMEM((B, C, 1), jnp.float32),
                            pltpu.VMEM((B, C, 1), jnp.float32)]),
        compiler_params=pltpu.CompilerParams(
            dimension_semantics=("arbitrary", "arbitrary"),
            vmem_limit_bytes=int(vmem_limit)),
    )(perm.astype(jnp.int32), lmda.astype(jnp.float32), x3)


# ------------------------------ Pass 1: stats ------------------------------ #

def _stats_kernel(x_ref, mu_ref, sigma_ref, *, eps, denom):
    # x_ref : VMEM (1, TC, HW); mu_ref/sigma_ref : VMEM (1, TC, 1) f32
    x = x_ref[...].astype(jnp.float32)
    mu = jnp.mean(x, axis=-1, keepdims=True)
    var = jnp.sum((x - mu) ** 2, axis=-1, keepdims=True) * (1.0 / denom)
    mu_ref[...] = mu
    sigma_ref[...] = jnp.sqrt(var + eps)


def _compute_stats(x3, tc, eps, vmem_limit):
    B, C, HW = x3.shape
    denom = float(max(HW - 1, 1))
    kernel = functools.partial(_stats_kernel, eps=eps, denom=denom)
    mu, sigma = pl.pallas_call(
        kernel,
        out_shape=(jax.ShapeDtypeStruct((B, C, 1), jnp.float32),
                   jax.ShapeDtypeStruct((B, C, 1), jnp.float32)),
        grid=(B, _cdiv(C, tc)),
        in_specs=[pl.BlockSpec((1, tc, HW), lambda b, c: (b, c, 0))],
        out_specs=(pl.BlockSpec((1, tc, 1), lambda b, c: (b, c, 0)),
                   pl.BlockSpec((1, tc, 1), lambda b, c: (b, c, 0))),
        compiler_params=pltpu.CompilerParams(
            dimension_semantics=("parallel", "parallel"),
            vmem_limit_bytes=int(vmem_limit)),
    )(x3)
    return mu, sigma


# ------------------------------ Pass 2: apply ------------------------------ #

def _apply_kernel(x_ref, coef_ref, o_ref, *, bf16_fma):
    # x_ref : VMEM (1, TC, HW); coef_ref : VMEM (1, TC, 2) f32 -> [scale, bias]
    coef = coef_ref[...]
    a = coef[:, :, 0:1]
    b = coef[:, :, 1:2]
    if bf16_fma:  # bf16-native VPU on v6e/v7x: halve VALU work + vreg bytes
        o_ref[...] = (x_ref[...] * a.astype(jnp.bfloat16)
                      + b.astype(jnp.bfloat16)).astype(o_ref.dtype)
    else:
        o_ref[...] = (x_ref[...].astype(jnp.float32) * a + b).astype(o_ref.dtype)


def _apply_affine(x3, coeffs, tc, vmem_limit):
    B, C, HW = x3.shape
    kernel = functools.partial(_apply_kernel, bf16_fma=(x3.dtype == jnp.bfloat16))
    return pl.pallas_call(
        kernel,
        out_shape=jax.ShapeDtypeStruct((B, C, HW), x3.dtype),
        grid=(B, _cdiv(C, tc)),
        in_specs=[pl.BlockSpec((1, tc, HW), lambda b, c: (b, c, 0)),
                  pl.BlockSpec((1, tc, 2), lambda b, c: (b, c, 0))],
        out_specs=pl.BlockSpec((1, tc, HW), lambda b, c: (b, c, 0)),
        compiler_params=pltpu.CompilerParams(
            dimension_semantics=("parallel", "parallel"),
            vmem_limit_bytes=int(vmem_limit)),
    )(x3, coeffs)


# ------------------------------- Full op ----------------------------------- #

def mixstyle_pallas(x, perm, lmda, *, eps=1e-6, force_two_pass=False):
    """Core mixing. x: (B, C, H, W); perm: (B,) int; lmda: (B,) float."""
    B, C, H, W = x.shape
    HW = H * W
    x3 = x.reshape(B, C, HW)
    itemsize = x.dtype.itemsize
    _, vmem_limit = _vmem_budget()

    # Fused single-pass path when x fits comfortably in VMEM: 2N HBM traffic.
    x_bytes = B * C * HW * itemsize
    out_blk_bytes = C * HW * itemsize
    scr_bytes = 2 * B * _round_up(C, 8) * 128 * 4
    fused_fits = (2 * x_bytes + 2 * out_blk_bytes + scr_bytes) <= int(0.75 * vmem_limit)
    if fused_fits and not force_two_pass:
        return _mixstyle_fused(x3, perm, lmda, eps, vmem_limit).reshape(B, C, H, W)

    # Two-pass path for large activations.
    blk_budget = vmem_limit - 8 * _MIB
    tc_stats = _choose_channel_tile(C, HW, itemsize, budget_bytes=blk_budget,
                                    streams=2, batch=B)   # read-only pass: 2x tiles
    tc_apply = _choose_channel_tile(C, HW, itemsize, budget_bytes=blk_budget,
                                    streams=4, batch=B)

    mu, sigma = _compute_stats(x3, tc_stats, eps, vmem_limit)      # (B, C, 1) f32

    # Tiny O(B*C) mixing math folded into one per-channel affine out = a*x + b.
    lam = lmda.reshape(B, 1, 1).astype(jnp.float32)
    mu2, sigma2 = mu[perm], sigma[perm]
    mu_mix = lam * mu + (1.0 - lam) * mu2
    sigma_mix = lam * sigma + (1.0 - lam) * sigma2
    a = sigma_mix / sigma
    b = mu_mix - mu * a
    coeffs = jnp.concatenate([a, b], axis=-1)                      # (B, C, 2) f32

    out = _apply_affine(x3, coeffs, tc_apply, vmem_limit)
    return out.reshape(B, C, H, W)


def mixstyle_op(x, key, *, p=0.5, alpha=0.1, eps=1e-6, mix='random'):
    """Full MixStyleOP.forward semantics (probability gate is host-side)."""
    # TODO(synk): inside a fully-jitted training step the gate needs lax.cond
    # with an on-device Bernoulli instead of host-side Python RNG.
    if random.random() > p:
        return x

    B = x.shape[0]
    k_lmda, k_perm, k_pb, k_pa = jax.random.split(key, 4)
    lmda = jax.random.beta(k_lmda, alpha, alpha, shape=(B,)).astype(jnp.float32)

    if mix == 'random':
        perm = jax.random.permutation(k_perm, B)
    elif mix == 'crossdomain':
        perm = jnp.arange(B - 1, -1, -1)
        half = B // 2
        perm_b, perm_a = perm[:half], perm[half:]
        perm_b = perm_b[jax.random.permutation(k_pb, perm_b.shape[0])]
        perm_a = perm_a[jax.random.permutation(k_pa, perm_a.shape[0])]
        perm = jnp.concatenate([perm_b, perm_a], axis=0)
    else:
        raise NotImplementedError

    return mixstyle_pallas(x, perm, lmda, eps=eps)


def _reference(x, perm, lmda, eps=1e-6):
    """Pure-JAX reference of the mixing math for verification."""
    mu = jnp.mean(x, axis=(2, 3), keepdims=True)
    var = jnp.var(x, axis=(2, 3), keepdims=True, ddof=1)
    sigma = jnp.sqrt(var + eps)
    x_normed = (x - mu) / sigma
    lam = lmda.reshape(-1, 1, 1, 1)
    mu2, sigma2 = mu[perm], sigma[perm]
    mu_mix = lam * mu + (1 - lam) * mu2
    sigma_mix = lam * sigma + (1 - lam) * sigma2
    return x_normed * sigma_mix + mu_mix


if __name__ == "__main__":
    key = jax.random.PRNGKey(0)
    kx, kop = jax.random.split(key)

    # ---- Fused path (small activation), via the full-op wrapper. ----
    B, C, H, W = 2, 4, 16, 16
    x = jax.random.normal(kx, (B, C, H, W), dtype=jnp.float32)

    # p=1.0 -> gate always passes, kernel path runs.
    out = mixstyle_op(x, kop, p=1.0, alpha=0.1, eps=1e-6, mix='random')
    out = jax.block_until_ready(out)

    k_lmda, k_perm, _, _ = jax.random.split(kop, 4)
    lmda = jax.random.beta(k_lmda, 0.1, 0.1, shape=(B,)).astype(jnp.float32)
    perm = jax.random.permutation(k_perm, B)
    ref = _reference(x, perm, lmda, eps=1e-6)
    assert out.shape == (B, C, H, W)
    assert jnp.allclose(out, ref, atol=1e-4, rtol=1e-4), "fused path mismatch"

    # ---- Two-pass tiled path, including a ragged channel tile (C=20). ----
    B2, C2, H2, W2 = 2, 20, 16, 16
    x2 = jax.random.normal(jax.random.PRNGKey(1), (B2, C2, H2, W2), jnp.float32)
    lmda2 = jax.random.beta(jax.random.PRNGKey(2), 0.1, 0.1, (B2,)).astype(jnp.float32)
    perm2 = jnp.array([1, 0], dtype=jnp.int32)
    out2 = jax.block_until_ready(
        mixstyle_pallas(x2, perm2, lmda2, eps=1e-6, force_two_pass=True))
    ref2 = _reference(x2, perm2, lmda2, eps=1e-6)
    assert jnp.allclose(out2, ref2, atol=1e-4, rtol=1e-4), "two-pass path mismatch"

    print("KERNEL_OK")
</pallas_src>

<mosaic_0001>
module attributes {stable_mosaic.version = 11 : i64} {
  func.func @_fused_kernel(%arg0: i32, %arg1: i32, %arg2: memref<2xi32, #tpu.memory_space<smem>>, %arg3: memref<2xf32, #tpu.memory_space<smem>>, %arg4: memref<2x4x256xf32, #tpu.memory_space<vmem>>, %arg5: memref<1x4x256xf32, #tpu.memory_space<vmem>>, %arg6: memref<2x4x1xf32, #tpu.memory_space<vmem>>, %arg7: memref<2x4x1xf32, #tpu.memory_space<vmem>>) attributes {dimension_semantics = [#tpu.dimension_semantics<arbitrary>, #tpu.dimension_semantics<arbitrary>], iteration_bounds = array<i64: 2, 2>, scalar_prefetch = 2 : i64, scratch_operands = 2 : i64, tpu.core_type = #tpu.core_type<tc>, window_params = [{pipeline_mode = #tpu.pipeline_mode<synchronous>, transform_indices = @transform_0, window_bounds = array<i64: 2, 4, 256>}, {transform_indices = @transform_1, window_bounds = array<i64: 1, 4, 256>}]} {
    %c0_i32 = arith.constant 0 : i32
    %0 = arith.cmpi eq, %arg0, %c0_i32 : i32
    %1 = arith.extui %0 : i1 to i32
    %c0_i32_0 = arith.constant 0 : i32
    %2 = arith.cmpi ne, %1, %c0_i32_0 : i32
    scf.if %2 {
      %6 = arith.index_cast %arg1 : i32 to index
      %c0 = arith.constant 0 : index
      %c0_2 = arith.constant 0 : index
      %7 = vector.load %arg4[%6, %c0, %c0_2] : memref<2x4x256xf32, #tpu.memory_space<vmem>>, vector<1x4x256xf32>
      %8 = vector.shape_cast %7 : vector<1x4x256xf32> to vector<4x256xf32>
      %cst = arith.constant dense<0.000000e+00> : vector<4xf32>
      %9 = vector.multi_reduction <add>, %8, %cst [1] : vector<4x256xf32> to vector<4xf32>
      %10 = vector.shape_cast %9 : vector<4xf32> to vector<4x1xf32>
      %cst_3 = arith.constant 2.560000e+02 : f32
      %11 = vector.broadcast %cst_3 : f32 to vector<4x1xf32>
      %12 = arith.divf %10, %11 : vector<4x1xf32>
      %13 = vector.broadcast %12 : vector<4x1xf32> to vector<4x256xf32>
      %14 = arith.subf %8, %13 : vector<4x256xf32>
      %15 = arith.mulf %14, %14 : vector<4x256xf32>
      %cst_4 = arith.constant dense<0.000000e+00> : vector<4xf32>
      %16 = vector.multi_reduction <add>, %15, %cst_4 [1] : vector<4x256xf32> to vector<4xf32>
      %17 = vector.shape_cast %16 : vector<4xf32> to vector<4x1xf32>
      %cst_5 = arith.constant 0.00392156886 : f32
      %18 = vector.broadcast %cst_5 : f32 to vector<4x1xf32>
      %19 = arith.mulf %17, %18 : vector<4x1xf32>
      %20 = arith.index_cast %arg1 : i32 to index
      %c0_6 = arith.constant 0 : index
      %c0_7 = arith.constant 0 : index
      %21 = vector.load %arg6[%20, %c0_6, %c0_7] : memref<2x4x1xf32, #tpu.memory_space<vmem>>, vector<1x4x1xf32>
      %22 = vector.shape_cast %21 : vector<1x4x1xf32> to vector<4x1xf32>
      %23 = vector.shape_cast %12 : vector<4x1xf32> to vector<1x4x1xf32>
      tpu.vector_store %arg6[%20, %c0_6, %c0_7], %23 {strides = array<i32>} : memref<2x4x1xf32, #tpu.memory_space<vmem>>, vector<1x4x1xf32>,
      %cst_8 = arith.constant 9.99999997E-7 : f32
      %24 = vector.broadcast %cst_8 : f32 to vector<4x1xf32>
      %25 = arith.addf %19, %24 : vector<4x1xf32>
      %26 = math.sqrt %25 : vector<4x1xf32>
      %27 = arith.index_cast %arg1 : i32 to index
      %c0_9 = arith.constant 0 : index
      %c0_10 = arith.constant 0 : index
      %28 = vector.load %arg7[%27, %c0_9, %c0_10] : memref<2x4x1xf32, #tpu.memory_space<vmem>>, vector<1x4x1xf32>
      %29 = vector.shape_cast %28 : vector<1x4x1xf32> to vector<4x1xf32>
      %30 = vector.shape_cast %26 : vector<4x1xf32> to vector<1x4x1xf32>
      tpu.vector_store %arg7[%27, %c0_9, %c0_10], %30 {strides = array<i32>} : memref<2x4x1xf32, #tpu.memory_space<vmem>>, vector<1x4x1xf32>,
    } else {
    }
    %c1_i32 = arith.constant 1 : i32
    %3 = arith.cmpi eq, %arg0, %c1_i32 : i32
    %4 = arith.extui %3 : i1 to i32
    %c0_i32_1 = arith.constant 0 : i32
    %5 = arith.cmpi ne, %4, %c0_i32_1 : i32
    scf.if %5 {
      %6 = arith.index_cast %arg1 : i32 to index
      %7 = memref.load %arg2[%6] : memref<2xi32, #tpu.memory_space<smem>>
      %8 = arith.index_cast %arg1 : i32 to index
      %9 = memref.load %arg3[%8] : memref<2xf32, #tpu.memory_space<smem>>
      %10 = arith.index_cast %arg1 : i32 to index
      %c0 = arith.constant 0 : index
      %c0_2 = arith.constant 0 : index
      %11 = vector.load %arg6[%10, %c0, %c0_2] : memref<2x4x1xf32, #tpu.memory_space<vmem>>, vector<1x4x1xf32>
      %12 = vector.shape_cast %11 : vector<1x4x1xf32> to vector<4x1xf32>
      %13 = arith.index_cast %arg1 : i32 to index
      %c0_3 = arith.constant 0 : index
      %c0_4 = arith.constant 0 : index
      %14 = vector.load %arg7[%13, %c0_3, %c0_4] : memref<2x4x1xf32, #tpu.memory_space<vmem>>, vector<1x4x1xf32>
      %15 = vector.shape_cast %14 : vector<1x4x1xf32> to vector<4x1xf32>
      %16 = arith.index_cast %7 : i32 to index
      %c0_5 = arith.constant 0 : index
      %c0_6 = arith.constant 0 : index
      %17 = vector.load %arg6[%16, %c0_5, %c0_6] : memref<2x4x1xf32, #tpu.memory_space<vmem>>, vector<1x4x1xf32>
      %18 = vector.shape_cast %17 : vector<1x4x1xf32> to vector<4x1xf32>
      %19 = arith.index_cast %7 : i32 to index
      %c0_7 = arith.constant 0 : index
      %c0_8 = arith.constant 0 : index
      %20 = vector.load %arg7[%19, %c0_7, %c0_8] : memref<2x4x1xf32, #tpu.memory_space<vmem>>, vector<1x4x1xf32>
      %21 = vector.shape_cast %20 : vector<1x4x1xf32> to vector<4x1xf32>
      %22 = vector.broadcast %9 : f32 to vector<4x1xf32>
      %23 = arith.mulf %22, %12 : vector<4x1xf32>
      %cst = arith.constant 1.000000e+00 : f32
      %24 = arith.subf %cst, %9 : f32
      %25 = vector.broadcast %24 : f32 to vector<4x1xf32>
      %26 = arith.mulf %25, %18 : vector<4x1xf32>
      %27 = arith.addf %23, %26 : vector<4x1xf32>
      %28 = vector.broadcast %9 : f32 to vector<4x1xf32>
      %29 = arith.mulf %28, %15 : vector<4x1xf32>
      %cst_9 = arith.constant 1.000000e+00 : f32
      %30 = arith.subf %cst_9, %9 : f32
      %31 = vector.broadcast %30 : f32 to vector<4x1xf32>
      %32 = arith.mulf %31, %21 : vector<4x1xf32>
      %33 = arith.addf %29, %32 : vector<4x1xf32>
      %34 = arith.divf %33, %15 : vector<4x1xf32>
      %35 = arith.mulf %12, %34 : vector<4x1xf32>
      %36 = arith.subf %27, %35 : vector<4x1xf32>
      %37 = arith.index_cast %arg1 : i32 to index
      %c0_10 = arith.constant 0 : index
      %c0_11 = arith.constant 0 : index
      %38 = vector.load %arg4[%37, %c0_10, %c0_11] : memref<2x4x256xf32, #tpu.memory_space<vmem>>, vector<1x4x256xf32>
      %39 = vector.shape_cast %38 : vector<1x4x256xf32> to vector<4x256xf32>
      %40 = vector.broadcast %34 : vector<4x1xf32> to vector<4x256xf32>
      %41 = arith.mulf %39, %40 : vector<4x256xf32>
      %42 = vector.broadcast %36 : vector<4x1xf32> to vector<4x256xf32>
      %43 = arith.addf %41, %42 : vector<4x256xf32>
      %c0_12 = arith.constant 0 : index
      %c0_13 = arith.constant 0 : index
      %c0_14 = arith.constant 0 : index
      %44 = vector.load %arg5[%c0_12, %c0_13, %c0_14] : memref<1x4x256xf32, #tpu.memory_space<vmem>>, vector<1x4x256xf32>
      %45 = vector.shape_cast %44 : vector<1x4x256xf32> to vector<4x256xf32>
      %46 = vector.shape_cast %43 : vector<4x256xf32> to vector<1x4x256xf32>
      tpu.vector_store %arg5[%c0_12, %c0_13, %c0_14], %46 {strides = array<i32>} : memref<1x4x256xf32, #tpu.memory_space<vmem>>, vector<1x4x256xf32>,
    } else {
    }
    return
  }
  func.func @transform_0(%arg0: i32, %arg1: i32, %arg2: memref<2xi32, #tpu.memory_space<smem>>, %arg3: memref<2xf32, #tpu.memory_space<smem>>) -> (i32, i32, i32) {
    %c0_i32 = arith.constant 0 : i32
    %c0_i32_0 = arith.constant 0 : i32
    %c0_i32_1 = arith.constant 0 : i32
    %c0_i32_2 = arith.constant 0 : i32
    return %c0_i32, %c0_i32_0, %c0_i32_1 : i32, i32, i32
  }
  func.func @transform_1(%arg0: i32, %arg1: i32, %arg2: memref<2xi32, #tpu.memory_space<smem>>, %arg3: memref<2xf32, #tpu.memory_space<smem>>) -> (i32, i32, i32) {
    %0 = arith.muli %arg0, %arg1 : i32
    %c0_i32 = arith.constant 0 : i32
    %c0_i32_0 = arith.constant 0 : i32
    %c0_i32_1 = arith.constant 0 : i32
    return %0, %c0_i32, %c0_i32_0 : i32, i32, i32
  }
}

</mosaic_0001>

<llo_original>
// kernel: tpu_custom_call.1
$region0: #{tpu_custom_call.1}
  #allocation0 [shape = 'u32[]', space=smem, size = 0x4, offset = 0x4, fixed_abs, tag = 'smem constant byte address 0x4 - core index']
  #allocation1 [shape = 'u32[144,128]{1,0:T(1,128)}', space=vmem, size = 0x12000, scoped, tag = 'internal scratch']
  #allocation2 [shape = 'f32[2,4,1]{2,1,0:T(4,128)}', space=vmem, size = 0x1000, scoped, tag = 'scratch operand']
  #allocation3 [shape = 'f32[2,4,1]{2,1,0:T(4,128)}', space=vmem, size = 0x1000, scoped, tag = 'scratch operand']
  #allocation4 [shape = 's32[1]{0}', space=sflag, size = 0x4, scoped, tag = 'scoped memory for tpu_custom_call.1']
  #allocation5 [shape = 'u8[512]{0}', space=smem, size = 0x200, scoped, tag = 'prefetched SMEM operand 0']
  #allocation6 [shape = 'u8[512]{0}', space=smem, size = 0x200, scoped, tag = 'prefetched SMEM operand 1']
  %s0 = inlined_call_operand.hbm [shape: s32[2], index: 0, kind: input, shape index: {}]
  %s1 = inlined_call_operand.vmem [shape: f32[2], index: 1, kind: input, shape index: {}]
  %s2 = inlined_call_operand.hbm [shape: f32[2,4,256], index: 2, kind: input, shape index: {}]
  %s3 = inlined_call_operand.hbm [shape: f32[2,4,256], index: 3, kind: output, shape index: {}]
  %s4 = sld [smem:[#allocation0]]
  $region49: #{tpu_custom_call.1} parent=0
    _
  %s6 = ssub.s32 1, %s4
  %s7 = scalar_select 0, %s6, %s4
  %9 = dma.hbm_to_smem %s0, 16, [#allocation5], [#allocation4]
  %s10 = sshll.u32 %s1, 4
  %s11 = int_to_ptr.vmem [resolvable:$true] %s10
  %13 = dma.vmem_to_smem %s11, 16, [#allocation6], [#allocation4]
  %14 = dma.done [#allocation4], 32
  %15 = sfence
  $region1: #{tpu_custom_call.1} parent=0
    #allocation7 [shape = 'u8[8192]{0}', space=vmem, size = 0x2000, scoped, tag = 'input window, operand 2, single buffered']
    #allocation8 [shape = 's32[2]{0}', space=sflag, size = 0x8, scoped, tag = 'scoped memory for tpu_custom_call.1']
    #allocation9 [shape = 's32[2]{0}', space=sflag, size = 0x8, scoped, tag = 'scoped memory for tpu_custom_call.1']
    #allocation10 [shape = 'u8[8192]{0}', space=vmem, size = 0x2000, scoped, tag = 'output window, operand 0']
    %16 = vsyncpa [#allocation8], 0
    %17 = vsyncpa [#allocation9], 0
    %s18 = scalar_lea.sflag [#allocation9], 1
    %19 = vsyncpa %s18, 0
    loop: start=0, step=1, limit=6
    $region2: #{tpu_custom_call.1} parent=1 // loop_pre_header
      _
    $region3: #{tpu_custom_call.1} parent=1 // loop_header
      %s21 = sphi 0, %s25
      %p22 = scmp.ge.s32.totalorder %s21, 6
      %s28 = sphi 0, %s40
      %s29 = sphi 0, %s36
      %s30 = sphi 0, %s28
      %s31 = sphi 0, %s29
      %s32 = sphi 0, %s30
      %s33 = sphi 0, %s31
      %s41 = sphi 0, %s41
      %s43 = sphi 0, %s41
      %s44 = sphi 0, %s43
      %s58 = sphi 0, %s44
      %s66 = sphi 0, %s68
      %s69 = sphi 0, %s66
      %s70 = sphi 0, %s69
      %s86 = sphi 0, %s70
    $region4: #{tpu_custom_call.1} parent=1 // loop_header_branch
      %24 = sbr.rel (%p22) target = $region8
    $region5: #{tpu_custom_call.1} parent=1 // loop_body
      %s26 = ssub.s32 %s21, 1
      %s27 = ssub.s32 %s21, 2
      %s34 = sadd.s32 1, %s29
      %p35 = scmp.ge.s32.totalorder %s34, 2
      %s36 = scalar_select %p35, 0, %s34
      %s37 = sadd.s32 1, %s28
      %s38 = scalar_select %p35, %s37, %s28
      %p39 = scmp.ge.s32.totalorder %s38, 2
      %s40 = scalar_select %p39, 0, %s38
      %s42 = sadd.s32 %s41, 1
      %p45 = scmp.eq.s32.totalorder %s21, 3
      %p46 = scmp.ne.s32.totalorder %s41, %s43
      %p47 = scmp.eq.s32.totalorder %s21, 0
      %p48 = por %p46, %p47
      %p49 = scmp.ne.s32.totalorder %s41, %s43
      %p50 = scmp.eq.s32.totalorder %s26, 3
      %p51 = por %p49, %p50
      %p52 = scmp.ne.s32.totalorder %s43, %s44
      %p53 = scmp.eq.s32.totalorder %s26, 0
      %p54 = por %p52, %p53
      %p55 = scmp.ne.s32.totalorder %s43, %s44
      %p56 = scmp.eq.s32.totalorder %s27, 3
      %p57 = por %p55, %p56
      %p59 = scmp.ne.s32.totalorder %s44, %s58
      %p60 = scmp.eq.s32.totalorder %s27, 0
      %p61 = por %p59, %p60
      %s62 = smul.u32 %s28, %s29
      %s63 = smul.u32 %s40, %s36
      %s64 = ssub.s32 %s62, %s63
      %p65 = scmp.eq.s32.totalorder %s64, 0
      %s67 = sadd.s32 %s66, 1
      %s68 = scalar_select %p65, %s66, %s67
      %p71 = pneg %p65
      %p72 = scmp.eq.s32.totalorder %s21, 3
      %p73 = por %p71, %p72
      %p74 = scmp.ne.s32.totalorder %s66, %s69
      %p75 = scmp.eq.s32.totalorder %s21, 0
      %p76 = por %p74, %p75
      %p77 = scmp.ne.s32.totalorder %s66, %s69
      %p78 = scmp.eq.s32.totalorder %s26, 3
      %p79 = por %p77, %p78
      %p80 = scmp.ne.s32.totalorder %s69, %s70
      %p81 = scmp.eq.s32.totalorder %s26, 0
      %p82 = por %p80, %p81
      %p83 = scmp.ne.s32.totalorder %s69, %s70
      %p84 = scmp.eq.s32.totalorder %s27, 3
      %p85 = por %p83, %p84
      %p87 = scmp.ne.s32.totalorder %s70, %s86
      %p88 = scmp.eq.s32.totalorder %s27, 0
      %p89 = por %p87, %p88
      %p90 = scmp.le.s32.totalorder 1, %s21
      %p91 = scmp.lt.s32.totalorder %s21, 5
      %p92 = pnand %p90, %p91
      %p93 = pneg %p92
      // Predicated region
      $region9: #{tpu_custom_call.1} parent=5 // pred_check
        _
      $region10: #{tpu_custom_call.1} parent=5 // pred_check_branch
        %95 = sbr.rel (%p92) target = $region12
      $region11: #{tpu_custom_call.1} parent=5 // pred_region
        %s96 = ssub.s32 %s21, 1
        // Predicated region
        $region13: #{tpu_custom_call.1} parent=11 // pred_check
          %p97 = pneg %p54
        $region14: #{tpu_custom_call.1} parent=11 // pred_check_branch
          %99 = sbr.rel (%p97) target = $region16
        $region15: #{tpu_custom_call.1} parent=11 // pred_region
          %s101 = ssub.s32 256, 256
          %102 = vsyncadd [#allocation8], %s101
          %s103 = sshll.u32 [#allocation7], 4
          %s104 = int_to_ptr.vmem [resolvable:$true] %s103
          %109 = dma.hbm_to_vmem [thread:$0]  %s2, 256, %s104, [#allocation8], 128, 128, 8
        $region16: #{tpu_custom_call.1} parent=11 // pred_fallthru
          _
      $region12: #{tpu_custom_call.1} parent=5 // pred_fallthru
        _
      %p110 = scmp.lt.s32.totalorder %s21, 4
      // Predicated region
      $region17: #{tpu_custom_call.1} parent=5 // pred_check
        %p111 = pneg %p110
      $region18: #{tpu_custom_call.1} parent=5 // pred_check_branch
        %113 = sbr.rel (%p111) target = $region20
      $region19: #{tpu_custom_call.1} parent=5 // pred_region
        _
      $region20: #{tpu_custom_call.1} parent=5 // pred_fallthru
        _
      %p114 = scmp.le.s32.totalorder 1, %s21
      %p115 = scmp.lt.s32.totalorder %s21, 5
      %p116 = pnand %p114, %p115
      %p117 = pneg %p116
      // Predicated region
      $region21: #{tpu_custom_call.1} parent=5 // pred_check
        _
      $region22: #{tpu_custom_call.1} parent=5 // pred_check_branch
        %119 = sbr.rel (%p116) target = $region24
      $region23: #{tpu_custom_call.1} parent=5 // pred_region
        %s120 = ssub.s32 %s21, 1
        // Predicated region
        $region25: #{tpu_custom_call.1} parent=23 // pred_check
          %p121 = pneg %p54
        $region26: #{tpu_custom_call.1} parent=23 // pred_check_branch
          %123 = sbr.rel (%p121) target = $region28
        $region27: #{tpu_custom_call.1} parent=23 // pred_region
          %124 = dma.done [#allocation8], 256
        $region28: #{tpu_custom_call.1} parent=23 // pred_fallthru
          _
        %p125 = pneg %p54
        %p126 = pneg %p51
        %p127 = pneg %p82
        %p128 = pneg %p79
        %s129 = sand.u32 %s69, 1
        %s130 = scalar_lea.sflag [#allocation9], %s129
        %s131 = sand.u32 %s69, 1
        %s132 = smul.addr %s131, 8
        %s133 = scalar_lea.vmem [#allocation10], %s132
        %s134 = smul.u32 %s30, %s31
        %p135 = scmp.eq.s32.totalorder %s30, 0
        // Predicated region
        $region29: #{tpu_custom_call.1} parent=23 // pred_check
          %p136 = pneg %p135
        $region30: #{tpu_custom_call.1} parent=23 // pred_check_branch
          %138 = sbr.rel (%p136) target = $region32
        $region31: #{tpu_custom_call.1} parent=23 // pred_region
          %s139 = smul.u32 %s31, 2
          %s140 = smul.addr %s139, 4
          %s141 = scalar_lea.vmem [#allocation7], %s140
          %v142 = vld [vmem:[%s141] sm:$0xff]
          %v144 = vcombine.high %v142, %v142
          %vm146 = vcmask 1043456
          %v147 = vsel %vm146, %v142, 0.0
          %v148 = vsel %vm146, %v144, 0.0
          %v149 = vadd.f32 %v147, %v148
          %150 = vadd.xlane.f32.xlu0 %v149
          %v151 = vpop.xlane.xlu0 %150
          %v152 = vrcp.pop 256.0
          %v153 = vmul.f32 %v151, %v152
          %v156 = vunpack.c.l.s4 839922192
          %v157 = vunpack.c.0.s8 %v156
          %v158 = vlaneseq
          %v159 = vshrl.u32 %v158, 7
          %v160 = vsub.s32 %v157, %v159
          %v161 = vrot.slane %v153, %v160
          %v163 = vsub.f32 %v142, %v161
          %v164 = vmul.f32 %v163, %v163
          %v166 = vcombine.high %v164, %v164
          %v168 = vsel %vm146, %v164, 0.0
          %v169 = vsel %vm146, %v166, 0.0
          %v170 = vadd.f32 %v168, %v169
          %171 = vadd.xlane.f32.xlu0 %v170
          %v172 = vpop.xlane.xlu0 %171
          %v173 = vmul.f32 %v172, 0.003921569
          %s174 = smul.u32 %s31, 4
          %s175 = scalar_lea.vmem [#allocation2], %s174
          %vm176 = vcmask 3072
          %177 = vst.msk [vmem:[%s175] sm:$0xf] %vm176, %v153
          %v178 = vadd.f32 %v173, 1e-06
          %v179 = vrsqrt.pop %v178
          %v180 = vmul.f32 %v178, %v179
          %vm181 = vcmp.eq.f32.partialorder %v178, inf
          %v182 = vsel %vm181, %v178, %v180
          %vm183 = vcmp.eq.f32.partialorder %v178, 0.0
          %v184 = vand.u32 %v178, 2147483648
          %v185 = vsel %vm183, %v184, %v182
          %s186 = scalar_lea.vmem [#allocation3], %s174
          %187 = vst.msk [vmem:[%s186] sm:$0xf] %vm176, %v185
        $region32: #{tpu_custom_call.1} parent=23 // pred_fallthru
          _
        %p188 = scmp.eq.s32.totalorder %s30, 1
        // Predicated region
        $region33: #{tpu_custom_call.1} parent=23 // pred_check
          %p189 = pneg %p188
        $region34: #{tpu_custom_call.1} parent=23 // pred_check_branch
          %191 = sbr.rel (%p189) target = $region36
        $region35: #{tpu_custom_call.1} parent=23 // pred_region
          %s192 = sld [smem:[#allocation5 + %s31]]
          %s193 = sld [smem:[#allocation6 + %s31]]
          %s194 = smul.u32 %s31, 4
          %s195 = scalar_lea.vmem [#allocation2], %s194
          %v196 = vld [vmem:[%s195] sm:$0xf]
          %s197 = scalar_lea.vmem [#allocation3], %s194
          %v198 = vld [vmem:[%s197] sm:$0xf]
          %s199 = smul.u32 %s192, 4
          %s200 = scalar_lea.vmem [#allocation2], %s199
          %v201 = vld [vmem:[%s200] sm:$0xf]
          %s202 = scalar_lea.vmem [#allocation3], %s199
          %v203 = vld [vmem:[%s202] sm:$0xf]
          %v204 = vstv %s193
          %v205 = vmul.f32 %v204, %v196
          %s206 = ssub.f32 1.0, %s193
          %v207 = vstv %s206
          %v208 = vmul.f32 %v207, %v201
          %v209 = vadd.f32 %v205, %v208
          %v210 = vmul.f32 %v204, %v198
          %v211 = vmul.f32 %v207, %v203
          %v212 = vadd.f32 %v210, %v211
          %v213 = vrcp.pop %v198
          %v214 = vmul.f32 %v212, %v213
          %v215 = vmul.f32 %v196, %v214
          %v216 = vsub.f32 %v209, %v215
          %s217 = smul.u32 %s31, 2
          %s218 = smul.addr %s217, 4
          %s219 = scalar_lea.vmem [#allocation7], %s218
          %v220 = vld [vmem:[%s219] sm:$0xff]
          %222 = vset.pattern.permute.xlu0 0
          %223 = vperm.xlu0 %222, %v214
          %v224 = vpop.permute.xlu0 %223
          %v226 = vunpack.c.l.s4 839922192
          %v227 = vunpack.c.0.s8 %v226
          %v228 = vlaneseq
          %v229 = vshrl.u32 %v228, 7
          %v230 = vsub.s32 %v227, %v229
          %v231 = vrot.slane %v224, %v230
          %v233 = vmul.f32 %v220, %v231
          %235 = vset.pattern.permute.xlu0 0
          %236 = vperm.xlu0 %235, %v216
          %v237 = vpop.permute.xlu0 %236
          %v239 = vunpack.c.l.s4 839922192
          %v240 = vunpack.c.0.s8 %v239
          %v241 = vlaneseq
          %v242 = vshrl.u32 %v241, 7
          %v243 = vsub.s32 %v240, %v242
          %v244 = vrot.slane %v237, %v243
          %v246 = vadd.f32 %v233, %v244
          %247 = vst [vmem:[%s133] sm:$0xff] %v246
        $region36: #{tpu_custom_call.1} parent=23 // pred_fallthru
          _
        %s248 = sand.u32 %s69, 1
        %s249 = scalar_lea.sflag [#allocation9], %s248
        %s250 = sand.u32 %s69, 1
        %s251 = smul.addr %s250, 8
        %s252 = scalar_lea.vmem [#allocation10], %s251
        // Predicated region
        $region37: #{tpu_custom_call.1} parent=23 // pred_check
          %p253 = pneg %p79
        $region38: #{tpu_custom_call.1} parent=23 // pred_check_branch
          %255 = sbr.rel (%p253) target = $region40
        $region39: #{tpu_custom_call.1} parent=23 // pred_region
          %s256 = smul.u32 %s30, %s31
          %s258 = ssub.s32 128, 128
          %259 = vsyncadd %s249, %s258
          %s260 = smul.addr %s256, 2
          %s261 = smul.addr %s260, 64
          %s262 = scalar_lea.hbm %s3, %s261
          %s264 = sshll.u32 %s252, 4
          %s265 = int_to_ptr.vmem [resolvable:$true] %s264
          %267 = dma.vmem_to_hbm [thread:$0]  %s265, 128, %s262, %s249
        $region40: #{tpu_custom_call.1} parent=23 // pred_fallthru
          _
      $region24: #{tpu_custom_call.1} parent=5 // pred_fallthru
        _
      %p268 = scmp.le.s32.totalorder 2, %s21
      // Predicated region
      $region41: #{tpu_custom_call.1} parent=5 // pred_check
        %p269 = pneg %p268
      $region42: #{tpu_custom_call.1} parent=5 // pred_check_branch
        %271 = sbr.rel (%p269) target = $region44
      $region43: #{tpu_custom_call.1} parent=5 // pred_region
        %s272 = ssub.s32 %s21, 2
        // Predicated region
        $region45: #{tpu_custom_call.1} parent=43 // pred_check
          %p273 = pneg %p85
        $region46: #{tpu_custom_call.1} parent=43 // pred_check_branch
          %275 = sbr.rel (%p273) target = $region48
        $region47: #{tpu_custom_call.1} parent=43 // pred_region
          %s276 = sand.u32 %s70, 1
          %s277 = scalar_lea.sflag [#allocation9], %s276
          %s278 = sand.u32 %s70, 1
          %s279 = smul.addr %s278, 8
          %s280 = scalar_lea.vmem [#allocation10], %s279
          %281 = dma.done %s277, 128
        $region48: #{tpu_custom_call.1} parent=43 // pred_fallthru
          _
      $region44: #{tpu_custom_call.1} parent=5 // pred_fallthru
        _
    $region6: #{tpu_custom_call.1} parent=1 // loop_footer
      %s25 = sadd.s32 1, %s21
    $region7: #{tpu_custom_call.1} parent=1 // loop_footer_branch
      %20 = sbr.rel target = $region3
    $region8: #{tpu_custom_call.1} parent=1 // loop_exit
      _
    %282 = vsyncpa [#allocation8], 1
    %s283 = scalar_lea.sflag [#allocation8], 1
    %284 = vsyncpa %s283, 1
    %285 = vsyncpa [#allocation9], 1
    %s286 = scalar_lea.sflag [#allocation9], 1
    %287 = vsyncpa %s286, 1

</llo_original>
